<compile_context>
chip_gen: v7x
topology: tpu7x:2x2x1
jax: 0.10.0
libtpu: 0.0.40
codegen_flags: <defaults>
</compile_context>

<pallas_src>
import jax
import jax.numpy as jnp
from jax.experimental import pallas as pl
from jax.experimental.pallas import tpu as pltpu


def _timeserise_kernel(x_ref, w1_ref, b1_ref, w2_ref, b2_ref, o_ref):
    # x_ref:  (TB, S*F)  one full sequence per row (streamed batch tile)
    # w1_ref: (S*F, S*K) block-diagonal W1 (resident)
    # b1_ref: (1, S*K)   bias_1 tiled S times (resident)
    # w2_ref: (S*K, O)   W2 stacked S times along rows (resident); contracting
    #                    against it performs the sum over the sequence dim
    # b2_ref: (1, O)     S * bias_2 (resident)
    # o_ref:  (TB, O)    final per-batch output tile
    h = jnp.dot(x_ref[...], w1_ref[...], preferred_element_type=jnp.float32)
    h = h + b1_ref[...]
    h = jnp.maximum(h, 0.01 * h)            # LeakyReLU, torch default slope 0.01
    y = jnp.dot(h, w2_ref[...], preferred_element_type=jnp.float32)
    y = y + b2_ref[...]
    o_ref[...] = y.astype(o_ref.dtype)


def timeserise_forward(x, w1, b1, w2, b2, *, block_b=4096):
    """x: (B, S, F); w1: (F, K); b1: (K,); w2: (K, O); b2: (O,). Returns (B, O)."""
    B, S, F = x.shape
    Fw, K = w1.shape
    O = w2.shape[1]
    assert Fw == F, "layer_1 feature dim must match X"
    assert b1.shape == (K,), "bias_1 must have K entries"
    # torch's `+ self.bias_2` only broadcasts when output_size == len(bias_2).
    assert b2.shape == (O,), "bias_2 must match output_size (module needs O == 4)"

    SF, SK = S * F, S * K

    # One row per batch item: free row-major reshape of X.
    x_rows = x.reshape(B, SF)

    # Resident packed weights (built once in the wrapper; tiny).
    w1_bd = jnp.kron(jnp.eye(S, dtype=w1.dtype), w1).astype(x.dtype)     # (SF, SK)
    b1_row = jnp.tile(b1, S).reshape(1, SK).astype(jnp.float32)          # (1, SK)
    w2_stack = jnp.tile(w2, (S, 1)).astype(jnp.float32)                  # (SK, O)
    b2_row = (jnp.float32(S) * b2).reshape(1, O).astype(jnp.float32)     # (1, O)

    # Batch-tile selection: multiple of 8 rows for tile legality; ~4 MiB of
    # real X bytes per step at the demo feature sizes.  Small B -> one full
    # tile; moderate B -> two tiles (v7x megacore); large B -> streamed tiles
    # with a cdiv grid (ragged last tile handled by Pallas block masking).
    block_b = max(8, (block_b // 8) * 8)
    if B > block_b:
        tb = block_b
    elif B >= 1024 and B % 16 == 0:
        tb = B // 2
    else:
        tb = B
    grid = (pl.cdiv(B, tb),)

    out = pl.pallas_call(
        _timeserise_kernel,
        out_shape=jax.ShapeDtypeStruct((B, O), jnp.float32),
        grid=grid,
        in_specs=[
            pl.BlockSpec((tb, SF), lambda i: (i, 0)),    # X rows (streamed)
            pl.BlockSpec((SF, SK), lambda i: (0, 0)),    # block-diag W1 (resident)
            pl.BlockSpec((1, SK), lambda i: (0, 0)),     # tiled bias_1 (resident)
            pl.BlockSpec((SK, O), lambda i: (0, 0)),     # stacked W2 (resident)
            pl.BlockSpec((1, O), lambda i: (0, 0)),      # S * bias_2 (resident)
        ],
        out_specs=pl.BlockSpec((tb, O), lambda i: (i, 0)),
        compiler_params=pltpu.CompilerParams(
            dimension_semantics=("parallel",),           # v7x: tiles across TCs
            vmem_limit_bytes=48 * 1024 * 1024,           # headroom on all gens
        ),
    )(x_rows, w1_bd, b1_row, w2_stack, b2_row)
    return out


def reference_forward(x, w1, b1, w2, b2):
    h = jnp.matmul(x, w1) + b1
    h = jnp.where(h >= 0, h, 0.01 * h)
    y = jnp.matmul(h, w2) + b2
    return jnp.sum(y, axis=1)


if __name__ == "__main__":
    # Shapes implied by the module: input_size = (len_seq=8, n_feature=32),
    # output_size=4 (bias_2 has 4 entries, so it only broadcasts when O == 4),
    # batch=2.
    B, S, F, O = 2, 8, 32, 4

    key = jax.random.PRNGKey(0)
    kx, k1, kb1, k2, kb2 = jax.random.split(key, 5)

    x = jax.random.normal(kx, (B, S, F), dtype=jnp.float32)
    w1 = jax.random.normal(k1, (F, 4), dtype=jnp.float32)    # layer_1
    b1 = jax.random.normal(kb1, (4,), dtype=jnp.float32)     # bias_1
    w2 = jax.random.normal(k2, (4, O), dtype=jnp.float32)    # layer_2
    b2 = jax.random.normal(kb2, (4,), dtype=jnp.float32)     # bias_2

    out = timeserise_forward(x, w1, b1, w2, b2)
    out = jax.block_until_ready(out)

    ref = reference_forward(x, w1, b1, w2, b2)
    assert out.shape == (B, O), out.shape
    assert jnp.allclose(out, ref, atol=1e-3, rtol=1e-3), "mismatch vs reference"

    print("KERNEL_OK")
</pallas_src>

<mosaic_0001>
module attributes {stable_mosaic.version = 11 : i64} {
  func.func @_timeserise_kernel(%arg0: i32, %arg1: memref<2x256xf32, #tpu.memory_space<vmem>>, %arg2: memref<256x32xf32, #tpu.memory_space<vmem>>, %arg3: memref<1x32xf32, #tpu.memory_space<vmem>>, %arg4: memref<32x4xf32, #tpu.memory_space<vmem>>, %arg5: memref<1x4xf32, #tpu.memory_space<vmem>>, %arg6: memref<2x4xf32, #tpu.memory_space<vmem>>) attributes {dimension_semantics = [#tpu.dimension_semantics<parallel>], iteration_bounds = array<i64: 1>, scalar_prefetch = 0 : i64, scratch_operands = 0 : i64, tpu.core_type = #tpu.core_type<tc>, window_params = [{transform_indices = @transform_0, window_bounds = array<i64: 2, 256>}, {pipeline_mode = #tpu.pipeline_mode<synchronous>, transform_indices = @transform_1, window_bounds = array<i64: 256, 32>}, {pipeline_mode = #tpu.pipeline_mode<synchronous>, transform_indices = @transform_2, window_bounds = array<i64: 1, 32>}, {pipeline_mode = #tpu.pipeline_mode<synchronous>, transform_indices = @transform_3, window_bounds = array<i64: 32, 4>}, {pipeline_mode = #tpu.pipeline_mode<synchronous>, transform_indices = @transform_4, window_bounds = array<i64: 1, 4>}, {transform_indices = @transform_5, window_bounds = array<i64: 2, 4>}]} {
    %c0 = arith.constant 0 : index
    %c0_0 = arith.constant 0 : index
    %0 = vector.load %arg1[%c0, %c0_0] : memref<2x256xf32, #tpu.memory_space<vmem>>, vector<2x256xf32>
    %c0_1 = arith.constant 0 : index
    %c0_2 = arith.constant 0 : index
    %1 = vector.load %arg2[%c0_1, %c0_2] : memref<256x32xf32, #tpu.memory_space<vmem>>, vector<256x32xf32>
    %cst = arith.constant dense<0.000000e+00> : vector<2x32xf32>
    %2 = tpu.matmul %0, %1, %cst {dimension_numbers = #tpu.dot_dimension_numbers<[1], [0], [0], [1], [0, 0, 1, 1], [], []>} : vector<2x256xf32>, vector<256x32xf32>, vector<2x32xf32> -> vector<2x32xf32>
    %c0_3 = arith.constant 0 : index
    %c0_4 = arith.constant 0 : index
    %3 = vector.load %arg3[%c0_3, %c0_4] : memref<1x32xf32, #tpu.memory_space<vmem>>, vector<1x32xf32>
    %4 = vector.broadcast %3 : vector<1x32xf32> to vector<2x32xf32>
    %5 = arith.addf %2, %4 : vector<2x32xf32>
    %cst_5 = arith.constant 0.00999999977 : f32
    %6 = vector.broadcast %cst_5 : f32 to vector<2x32xf32>
    %7 = arith.mulf %6, %5 : vector<2x32xf32>
    %8 = arith.maximumf %5, %7 : vector<2x32xf32>
    %c0_6 = arith.constant 0 : index
    %c0_7 = arith.constant 0 : index
    %9 = vector.load %arg4[%c0_6, %c0_7] : memref<32x4xf32, #tpu.memory_space<vmem>>, vector<32x4xf32>
    %cst_8 = arith.constant dense<0.000000e+00> : vector<2x4xf32>
    %10 = tpu.matmul %8, %9, %cst_8 {dimension_numbers = #tpu.dot_dimension_numbers<[1], [0], [0], [1], [0, 0, 1, 1], [], []>} : vector<2x32xf32>, vector<32x4xf32>, vector<2x4xf32> -> vector<2x4xf32>
    %c0_9 = arith.constant 0 : index
    %c0_10 = arith.constant 0 : index
    %11 = vector.load %arg5[%c0_9, %c0_10] : memref<1x4xf32, #tpu.memory_space<vmem>>, vector<1x4xf32>
    %12 = vector.broadcast %11 : vector<1x4xf32> to vector<2x4xf32>
    %13 = arith.addf %10, %12 : vector<2x4xf32>
    %c0_11 = arith.constant 0 : index
    %c0_12 = arith.constant 0 : index
    %14 = vector.load %arg6[%c0_11, %c0_12] : memref<2x4xf32, #tpu.memory_space<vmem>>, vector<2x4xf32>
    tpu.vector_store %arg6[%c0_11, %c0_12], %13 {strides = array<i32>} : memref<2x4xf32, #tpu.memory_space<vmem>>, vector<2x4xf32>,
    return
  }
  func.func @transform_0(%arg0: i32) -> (i32, i32) {
    %c0_i32 = arith.constant 0 : i32
    %c0_i32_0 = arith.constant 0 : i32
    return %arg0, %c0_i32 : i32, i32
  }
  func.func @transform_1(%arg0: i32) -> (i32, i32) {
    %c0_i32 = arith.constant 0 : i32
    %c0_i32_0 = arith.constant 0 : i32
    %c0_i32_1 = arith.constant 0 : i32
    return %c0_i32, %c0_i32_0 : i32, i32
  }
  func.func @transform_2(%arg0: i32) -> (i32, i32) {
    %c0_i32 = arith.constant 0 : i32
    %c0_i32_0 = arith.constant 0 : i32
    %c0_i32_1 = arith.constant 0 : i32
    return %c0_i32, %c0_i32_0 : i32, i32
  }
  func.func @transform_3(%arg0: i32) -> (i32, i32) {
    %c0_i32 = arith.constant 0 : i32
    %c0_i32_0 = arith.constant 0 : i32
    %c0_i32_1 = arith.constant 0 : i32
    return %c0_i32, %c0_i32_0 : i32, i32
  }
  func.func @transform_4(%arg0: i32) -> (i32, i32) {
    %c0_i32 = arith.constant 0 : i32
    %c0_i32_0 = arith.constant 0 : i32
    %c0_i32_1 = arith.constant 0 : i32
    return %c0_i32, %c0_i32_0 : i32, i32
  }
  func.func @transform_5(%arg0: i32) -> (i32, i32) {
    %c0_i32 = arith.constant 0 : i32
    %c0_i32_0 = arith.constant 0 : i32
    return %arg0, %c0_i32 : i32, i32
  }
}

</mosaic_0001>

<llo_original>
// kernel: tpu_custom_call.1
$region0: #{tpu_custom_call.1}
  #allocation0 [shape = 'u32[]', space=smem, size = 0x4, offset = 0x4, fixed_abs, tag = 'smem constant byte address 0x4 - core index']
  #allocation1 [shape = 'u32[144,128]{1,0:T(1,128)}', space=vmem, size = 0x12000, scoped, tag = 'internal scratch']
  %s0 = inlined_call_operand.vmem [shape: f32[2,256], index: 0, kind: input, shape index: {}]
  %s1 = inlined_call_operand.vmem [shape: f32[256,32], index: 1, kind: input, shape index: {}]
  %s2 = inlined_call_operand.vmem [shape: f32[1,32], index: 2, kind: input, shape index: {}]
  %s3 = inlined_call_operand.vmem [shape: f32[32,4], index: 3, kind: input, shape index: {}]
  %s4 = inlined_call_operand.vmem [shape: f32[1,4], index: 4, kind: input, shape index: {}]
  %s5 = inlined_call_operand.hbm [shape: f32[2,4], index: 5, kind: output, shape index: {}]
  %s6 = sld [smem:[#allocation0]]
  $region30: #{tpu_custom_call.1} parent=0
    _
  %s8 = ssub.s32 1, %s6
  %s9 = scalar_select 0, %s8, %s6
  $region1: #{tpu_custom_call.1} parent=0
    #allocation2 [shape = 'u8[1024]{0}', space=vmem, size = 0x400, scoped, tag = 'output window, operand 0, single buffered']
    #allocation3 [shape = 's32[1]{0}', space=sflag, size = 0x4, scoped, tag = 'scoped memory for tpu_custom_call.1']
    %10 = vsyncpa [#allocation3], 0
    // Predicated region
    $region2: #{tpu_custom_call.1} parent=1 // pred_check
      _
    $region3: #{tpu_custom_call.1} parent=1 // pred_check_branch
      %12 = sbr.rel (0) target = $region5
    $region4: #{tpu_custom_call.1} parent=1 // pred_region
      _
    $region5: #{tpu_custom_call.1} parent=1 // pred_fallthru
      _
    // Predicated region
    $region6: #{tpu_custom_call.1} parent=1 // pred_check
      _
    $region7: #{tpu_custom_call.1} parent=1 // pred_check_branch
      %14 = sbr.rel (0) target = $region9
    $region8: #{tpu_custom_call.1} parent=1 // pred_region
      _
    $region9: #{tpu_custom_call.1} parent=1 // pred_fallthru
      _
    // Predicated region
    $region10: #{tpu_custom_call.1} parent=1 // pred_check
      _
    $region11: #{tpu_custom_call.1} parent=1 // pred_check_branch
      %16 = sbr.rel (0) target = $region13
    $region12: #{tpu_custom_call.1} parent=1 // pred_region
      _
    $region13: #{tpu_custom_call.1} parent=1 // pred_fallthru
      _
    // Predicated region
    $region14: #{tpu_custom_call.1} parent=1 // pred_check
      _
    $region15: #{tpu_custom_call.1} parent=1 // pred_check_branch
      %18 = sbr.rel (0) target = $region17
    $region16: #{tpu_custom_call.1} parent=1 // pred_region
      _
    $region17: #{tpu_custom_call.1} parent=1 // pred_fallthru
      _
    // Predicated region
    $region18: #{tpu_custom_call.1} parent=1 // pred_check
      _
    $region19: #{tpu_custom_call.1} parent=1 // pred_check_branch
      %20 = sbr.rel (0) target = $region21
    $region20: #{tpu_custom_call.1} parent=1 // pred_region
      _
    $region21: #{tpu_custom_call.1} parent=1 // pred_fallthru
      _
    %v21 = vld [vmem:[%s0] sm:$0xf]
    %v22 = vld [vmem:[%s1] sm:$0xff]
    %v23 = vld [vmem:[%s1 + $0x8] sm:$0xff]
    %v24 = vld [vmem:[%s1 + $0x10] sm:$0xff]
    %v25 = vld [vmem:[%s1 + $0x18] sm:$0xff]
    %v26 = vld [vmem:[%s1 + $0x20] sm:$0xff]
    %v27 = vld [vmem:[%s1 + $0x28] sm:$0xff]
    %v28 = vld [vmem:[%s1 + $0x30] sm:$0xff]
    %v29 = vld [vmem:[%s1 + $0x38] sm:$0xff]
    %v30 = vld [vmem:[%s1 + $0x40] sm:$0xff]
    %v31 = vld [vmem:[%s1 + $0x48] sm:$0xff]
    %v32 = vld [vmem:[%s1 + $0x50] sm:$0xff]
    %v33 = vld [vmem:[%s1 + $0x58] sm:$0xff]
    %v34 = vld [vmem:[%s1 + $0x60] sm:$0xff]
    %v35 = vld [vmem:[%s1 + $0x68] sm:$0xff]
    %v36 = vld [vmem:[%s1 + $0x70] sm:$0xff]
    %v37 = vld [vmem:[%s1 + $0x78] sm:$0xff]
    %v38 = vld [vmem:[%s1 + $0x80] sm:$0xff]
    %v39 = vld [vmem:[%s1 + $0x88] sm:$0xff]
    %v40 = vld [vmem:[%s1 + $0x90] sm:$0xff]
    %v41 = vld [vmem:[%s1 + $0x98] sm:$0xff]
    %v42 = vld [vmem:[%s1 + $0xa0] sm:$0xff]
    %v43 = vld [vmem:[%s1 + $0xa8] sm:$0xff]
    %v44 = vld [vmem:[%s1 + $0xb0] sm:$0xff]
    %v45 = vld [vmem:[%s1 + $0xb8] sm:$0xff]
    %v46 = vld [vmem:[%s1 + $0xc0] sm:$0xff]
    %v47 = vld [vmem:[%s1 + $0xc8] sm:$0xff]
    %v48 = vld [vmem:[%s1 + $0xd0] sm:$0xff]
    %v49 = vld [vmem:[%s1 + $0xd8] sm:$0xff]
    %v50 = vld [vmem:[%s1 + $0xe0] sm:$0xff]
    %v51 = vld [vmem:[%s1 + $0xe8] sm:$0xff]
    %v52 = vld [vmem:[%s1 + $0xf0] sm:$0xff]
    %v53 = vld [vmem:[%s1 + $0xf8] sm:$0xff]
    %v54 = vld [vmem:[%s2] sm:$0x1]
    %v56 = vlaneseq
    %v57 = vshrl.u32 %v56, 7
    %v58 = vsub.s32 0, %v57
    %v59 = vrot.slane %v54, %v58
    %v63 = vunpack.c.l.s4 1983009808
    %v64 = vunpack.c.0.s8 %v63
    %v65 = vlaneseq
    %v66 = vshrl.u32 %v65, 7
    %v67 = vsub.s32 %v64, %v66
    %v68 = vrot.slane %v21, %v67
    %v69 = vcombine.high %v68, %v68
    %72 = vmatprep.subr.mxu0 0.0
    %73 = vmatpush1.msra.mxu0 %v22
    %74 = vmatprep.subr.mxu0 0.0
    %75 = vmatpush1.msra.mxu0 %v23
    %76 = vmatprep.subr.mxu0 0.0
    %77 = vmatpush1.msra.mxu0 %v24
    %78 = vmatprep.subr.mxu0 0.0
    %79 = vmatpush1.msra.mxu0 %v25
    %80 = vmatprep.subr.mxu0 0.0
    %81 = vmatpush1.msra.mxu0 %v26
    %82 = vmatprep.subr.mxu0 0.0
    %83 = vmatpush1.msra.mxu0 %v27
    %84 = vmatprep.subr.mxu0 0.0
    %85 = vmatpush1.msra.mxu0 %v28
    %86 = vmatprep.subr.mxu0 0.0
    %87 = vmatpush1.msra.mxu0 %v29
    %88 = vmatprep.subr.mxu0 0.0
    %89 = vmatpush1.msra.mxu0 %v30
    %90 = vmatprep.subr.mxu0 0.0
    %91 = vmatpush1.msra.mxu0 %v31
    %92 = vmatprep.subr.mxu0 0.0
    %93 = vmatpush1.msra.mxu0 %v32
    %94 = vmatprep.subr.mxu0 0.0
    %95 = vmatpush1.msra.mxu0 %v33
    %96 = vmatprep.subr.mxu0 0.0
    %97 = vmatpush1.msra.mxu0 %v34
    %98 = vmatprep.subr.mxu0 0.0
    %99 = vmatpush1.msra.mxu0 %v35
    %100 = vmatprep.subr.mxu0 0.0
    %101 = vmatpush1.msra.mxu0 %v36
    %102 = vmatprep.subr.mxu0 0.0
    %103 = vmatpush1.msra.mxu0 %v37
    %104 = vmatprep.subr.mxu0 0.0
    %105 = vmatpush1.msra.mxu0 %v38
    %106 = vmatprep.subr.mxu0 0.0
    %107 = vmatpush1.msra.mxu0 %v39
    %108 = vmatprep.subr.mxu0 0.0
    %109 = vmatpush1.msra.mxu0 %v40
    %110 = vmatprep.subr.mxu0 0.0
    %111 = vmatpush1.msra.mxu0 %v41
    %112 = vmatprep.subr.mxu0 0.0
    %113 = vmatpush1.msra.mxu0 %v42
    %114 = vmatprep.subr.mxu0 0.0
    %115 = vmatpush1.msra.mxu0 %v43
    %116 = vmatprep.subr.mxu0 0.0
    %117 = vmatpush1.msra.mxu0 %v44
    %118 = vmatprep.subr.mxu0 0.0
    %119 = vmatpush1.msra.mxu0 %v45
    %120 = vmatprep.subr.mxu0 0.0
    %121 = vmatpush1.msra.mxu0 %v46
    %122 = vmatprep.subr.mxu0 0.0
    %123 = vmatpush1.msra.mxu0 %v47
    %124 = vmatprep.subr.mxu0 0.0
    %125 = vmatpush1.msra.mxu0 %v48
    %126 = vmatprep.subr.mxu0 0.0
    %127 = vmatpush1.msra.mxu0 %v49
    %128 = vmatprep.subr.mxu0 0.0
    %129 = vmatpush1.msra.mxu0 %v50
    %130 = vmatprep.subr.mxu0 0.0
    %131 = vmatpush1.msra.mxu0 %v51
    %132 = vmatprep.subr.mxu0 0.0
    %133 = vmatpush1.msra.mxu0 %v52
    %134 = vmatprep.subr.mxu0 0.0
    %135 = vmatpush1.msra.mxu0 %v53
    %136 = vmatprep.mubr.f32.mxu0 %v69
    %137 = vmatmul.mubr.f32.gmra.mrb[0].mxu0 %v68
    %v138 = vpop.f32.mrb[0].mxu0
    %v139 = vadd.f32 %v59, %v138
    %v140 = vpop.f32.mrb[0].mxu0
    %141 = vdwg.mxu0
    %v142 = vmul.f32 %v139, 0.01
    %v143 = vmax.f32 %v139, %v142
    %v144 = vld [vmem:[%s3] sm:$0xff]
    %v145 = vld [vmem:[%s3 + $0x8] sm:$0xff]
    %v146 = vld [vmem:[%s3 + $0x10] sm:$0xff]
    %v147 = vld [vmem:[%s3 + $0x18] sm:$0xff]
    %v148 = vld [vmem:[%s4] sm:$0x1]
    %v150 = vlaneseq
    %v151 = vshrl.u32 %v150, 7
    %v152 = vsub.s32 0, %v151
    %v153 = vrot.slane %v148, %v152
    %vm155 = vcmask 261120
    %v157 = vsel %vm155, %v143, 0
    %159 = vmatprep.subr.mxu0 0.0
    %160 = vmatpush1.msra.mxu0 %v144
    %161 = vmatprep.subr.mxu0 0.0
    %162 = vmatpush1.msra.mxu0 %v145
    %163 = vmatprep.subr.mxu0 0.0
    %164 = vmatpush1.msra.mxu0 %v146
    %165 = vmatprep.subr.mxu0 0.0
    %166 = vmatpush1.msra.mxu0 %v147
    %167 = vmatprep.subr.mxu0 0.0
    %168 = vmatpush1.msra.mxu0 0.0
    %169 = vmatprep.subr.mxu0 0.0
    %170 = vmatpush1.msra.mxu0 0.0
    %171 = vmatprep.subr.mxu0 0.0
    %172 = vmatpush1.msra.mxu0 0.0
    %173 = vmatprep.subr.mxu0 0.0
    %174 = vmatpush1.msra.mxu0 0.0
    %175 = vmatprep.subr.mxu0 0.0
    %176 = vmatpush1.msra.mxu0 0.0
    %177 = vmatprep.subr.mxu0 0.0
    %178 = vmatpush1.msra.mxu0 0.0
    %179 = vmatprep.subr.mxu0 0.0
    %180 = vmatpush1.msra.mxu0 0.0
    %181 = vmatprep.subr.mxu0 0.0
    %182 = vmatpush1.msra.mxu0 0.0
    %183 = vmatprep.subr.mxu0 0.0
    %184 = vmatpush1.msra.mxu0 0.0
    %185 = vmatprep.subr.mxu0 0.0
    %186 = vmatpush1.msra.mxu0 0.0
    %187 = vmatprep.subr.mxu0 0.0
    %188 = vmatpush1.msra.mxu0 0.0
    %189 = vmatprep.subr.mxu0 0.0
    %190 = vmatpush1.msra.mxu0 0.0
    %191 = vmatprep.subr.mxu0 0.0
    %192 = vmatpush1.msra.mxu0 0.0
    %193 = vmatprep.subr.mxu0 0.0
    %194 = vmatpush1.msra.mxu0 0.0
    %195 = vmatprep.subr.mxu0 0.0
    %196 = vmatpush1.msra.mxu0 0.0
    %197 = vmatprep.subr.mxu0 0.0
    %198 = vmatpush1.msra.mxu0 0.0
    %199 = vmatprep.subr.mxu0 0.0
    %200 = vmatpush1.msra.mxu0 0.0
    %201 = vmatprep.subr.mxu0 0.0
    %202 = vmatpush1.msra.mxu0 0.0
    %203 = vmatprep.subr.mxu0 0.0
    %204 = vmatpush1.msra.mxu0 0.0
    %205 = vmatprep.subr.mxu0 0.0
    %206 = vmatpush1.msra.mxu0 0.0
    %207 = vmatprep.subr.mxu0 0.0
    %208 = vmatpush1.msra.mxu0 0.0
    %209 = vmatprep.subr.mxu0 0.0
    %210 = vmatpush1.msra.mxu0 0.0
    %211 = vmatprep.subr.mxu0 0.0
    %212 = vmatpush1.msra.mxu0 0.0
    %213 = vmatprep.subr.mxu0 0.0
    %214 = vmatpush1.msra.mxu0 0.0
    %215 = vmatprep.subr.mxu0 0.0
    %216 = vmatpush1.msra.mxu0 0.0
    %217 = vmatprep.subr.mxu0 0.0
    %218 = vmatpush1.msra.mxu0 0.0
    %219 = vmatprep.subr.mxu0 0.0
    %220 = vmatpush1.msra.mxu0 0.0
    %221 = vmatprep.subr.mxu0 0.0
    %222 = vmatpush1.msra.mxu0 0.0
    %223 = vmatprep.mubr.f32.mxu0 0.0
    %224 = vmatmul.mubr.f32.gmra.mrb[0].mxu0 %v157
    %v225 = vpop.f32.mrb[0].mxu0
    %v226 = vadd.f32 %v153, %v225
    %v227 = vpop.f32.mrb[0].mxu0
    %228 = vdwg.mxu0
    %vm229 = vcmask 25600
    %230 = vst.msk [vmem:[#allocation2] sm:$0x3] %vm229, %v226
    // Predicated region
    $region22: #{tpu_custom_call.1} parent=1 // pred_check
      _
    $region23: #{tpu_custom_call.1} parent=1 // pred_check_branch
      %232 = sbr.rel (0) target = $region25
    $region24: #{tpu_custom_call.1} parent=1 // pred_region
      %s234 = ssub.s32 32, 32
      %235 = vsyncadd [#allocation3], %s234
      %s237 = sshll.u32 [#allocation2], 4
      %s238 = int_to_ptr.vmem [resolvable:$true] %s237
      %240 = dma.vmem_to_hbm [thread:$0]  %s238, 32, %s5, [#allocation3]
    $region25: #{tpu_custom_call.1} parent=1 // pred_fallthru
      _
    // Predicated region
    $region26: #{tpu_custom_call.1} parent=1 // pred_check
      _
    $region27: #{tpu_custom_call.1} parent=1 // pred_check_branch
      %242 = sbr.rel (0) target = $region29
    $region28: #{tpu_custom_call.1} parent=1 // pred_region
      %243 = dma.done [#allocation3], 32
    $region29: #{tpu_custom_call.1} parent=1 // pred_fallthru
      _
    %244 = vsyncpa [#allocation3], 1

</llo_original>
